<compile_context>
chip_gen: v7x
topology: tpu7x:2x2x1
jax: 0.10.0
libtpu: 0.0.40
codegen_flags: <defaults>
</compile_context>

<pallas_src>
import functools

import jax
import jax.numpy as jnp
from jax.experimental import pallas as pl
from jax.experimental.pallas import tpu as pltpu


def _shift1d_nhc_kernel(x_ref, o_ref, *, nb_shifts: int, stride: int):
    """One grid step: a block of nB batch rows, (nB, H, C) -> (nB, H, K*C)."""
    x = x_ref[...]                                  # (nB, H, C)
    nB, H, C = x.shape

    # Piece 0: identity, stored straight into its output slice.
    o_ref[:, :, 0:C] = x

    # Hoisted once (JAX does not CSE broadcast_in_dim / iota inside loops).
    row = jax.lax.broadcasted_iota(jnp.int32, (nB, H, C), 1)
    zero = jnp.zeros_like(x)

    for n in range(nb_shifts):
        m = (n + 1) * stride
        # roll is cyclic mod H; the masks below already make m >= H all-zero,
        # so keep the shift amount in [0, H) for safety.
        m_eff = m % H

        # x0[h] = x[h + m] for h < H - m, else 0   (pad bottom, drop first m rows)
        x_up = pltpu.roll(x, shift=(H - m_eff) % H, axis=1)      # == roll by -m
        o_ref[:, :, (2 * n + 1) * C:(2 * n + 2) * C] = jnp.where(
            row < H - m, x_up, zero)

        # x1[h] = x[h - m] for h >= m, else 0      (pad top, drop last m rows)
        x_dn = pltpu.roll(x, shift=m_eff, axis=1)
        o_ref[:, :, (2 * n + 2) * C:(2 * n + 3) * C] = jnp.where(
            row >= m, x_dn, zero)


def _pick_batch_block(N, H, C, K, itemsize, vmem_budget_bytes=32 << 20):
    """Largest batch-block keeping double-buffered (in + out) under budget.

    Prefers leaving >= 2 grid steps so both v7x TensorCores get work; the
    budget (32 MiB double-buffered) stays within the scoped-VMEM defaults of
    v5e/v6e/v7x once vmem_limit_bytes is raised modestly below.
    """
    per_batch = (1 + K) * H * C * itemsize          # in + out bytes, one batch row
    max_nb = max(1, int(vmem_budget_bytes // (2 * per_batch)))
    divisors = [d for d in range(1, N + 1) if N % d == 0 and d <= max_nb]
    if not divisors:
        return 1
    pref = [d for d in divisors if N // d >= 2]
    return max(pref) if pref else max(divisors)


def shift1d_nhc(x, kernel_size: int = 3, stride_input: int = 1):
    """Pallas equivalent of Shift1d_nhc.forward. x: (N, H, C)."""
    N, H, C = x.shape
    nb_shifts = kernel_size // 2
    K = 1 + 2 * nb_shifts

    nB = _pick_batch_block(N, H, C, K, jnp.dtype(x.dtype).itemsize)

    kernel = functools.partial(
        _shift1d_nhc_kernel, nb_shifts=nb_shifts, stride=stride_input
    )

    return pl.pallas_call(
        kernel,
        out_shape=jax.ShapeDtypeStruct((N, H, K * C), x.dtype),
        grid=(N // nB,),
        in_specs=[pl.BlockSpec((nB, H, C), lambda b: (b, 0, 0))],
        out_specs=pl.BlockSpec((nB, H, K * C), lambda b: (b, 0, 0)),
        compiler_params=pltpu.CompilerParams(
            dimension_semantics=("parallel",),
            vmem_limit_bytes=48 << 20,   # blocks budgeted at <= 32 MiB double-buffered
        ),
    )(x)


def shift1d_nhc_reference(x, kernel_size: int = 3, stride_input: int = 1):
    """Pure-JAX reference mirroring the PyTorch forward exactly."""
    N, H, C = x.shape
    nb_shifts = kernel_size // 2
    outs = [x]
    for n in range(nb_shifts):
        m = (n + 1) * stride_input
        zeros = jnp.zeros((N, m, C), dtype=x.dtype)
        x0 = jnp.concatenate([x[:, m:, :], zeros], axis=1)
        x1 = jnp.concatenate([zeros, x[:, : H - m, :]], axis=1)
        outs.append(x0)
        outs.append(x1)
    return jnp.concatenate(outs, axis=2)


if __name__ == "__main__":
    key = jax.random.PRNGKey(0)
    N, H, C = 2, 16, 32  # batch, sequence length, channels
    x = jax.random.normal(key, (N, H, C), dtype=jnp.float32)

    out = shift1d_nhc(x, kernel_size=3, stride_input=1)
    out = jax.block_until_ready(out)

    ref = shift1d_nhc_reference(x, kernel_size=3, stride_input=1)
    assert out.shape == (N, H, 3 * C), out.shape
    assert jnp.array_equal(out, ref), "mismatch vs reference"

    print("KERNEL_OK")
</pallas_src>

<mosaic_0001>
module attributes {stable_mosaic.version = 11 : i64} {
  func.func @_shift1d_nhc_kernel(%arg0: i32, %arg1: memref<1x16x32xf32, #tpu.memory_space<vmem>>, %arg2: memref<1x16x96xf32, #tpu.memory_space<vmem>>) attributes {dimension_semantics = [#tpu.dimension_semantics<parallel>], iteration_bounds = array<i64: 2>, scalar_prefetch = 0 : i64, scratch_operands = 0 : i64, tpu.core_type = #tpu.core_type<tc>, window_params = [{transform_indices = @transform_0, window_bounds = array<i64: 1, 16, 32>}, {transform_indices = @transform_1, window_bounds = array<i64: 1, 16, 96>}]} {
    %c0 = arith.constant 0 : index
    %c0_0 = arith.constant 0 : index
    %c0_1 = arith.constant 0 : index
    %0 = vector.load %arg1[%c0, %c0_0, %c0_1] : memref<1x16x32xf32, #tpu.memory_space<vmem>>, vector<1x16x32xf32>
    %c0_2 = arith.constant 0 : index
    %c0_3 = arith.constant 0 : index
    %c0_4 = arith.constant 0 : index
    %1 = vector.load %arg2[%c0_2, %c0_3, %c0_4] : memref<1x16x96xf32, #tpu.memory_space<vmem>>, vector<1x16x32xf32>
    tpu.vector_store %arg2[%c0_2, %c0_3, %c0_4], %0 {strides = array<i32>} : memref<1x16x96xf32, #tpu.memory_space<vmem>>, vector<1x16x32xf32>,
    %2 = tpu.iota {dimensions = array<i32: 1>} : vector<1x16x32xi32>
    %cst = arith.constant 0.000000e+00 : f32
    %3 = vector.broadcast %cst : f32 to vector<1x16x32xf32>
    %c15_i32 = arith.constant 15 : i32
    %4 = tpu.dynamic_rotate %0 by %c15_i32 dim 1 : vector<1x16x32xf32>, i32 -> vector<1x16x32xf32>
    %c15_i32_5 = arith.constant 15 : i32
    %5 = vector.broadcast %c15_i32_5 : i32 to vector<1x16x32xi32>
    %6 = arith.cmpi slt, %2, %5 : vector<1x16x32xi32>
    %7 = arith.select %6, %4, %3 : vector<1x16x32xi1>, vector<1x16x32xf32>
    %c0_6 = arith.constant 0 : index
    %c0_7 = arith.constant 0 : index
    %c32 = arith.constant 32 : index
    %8 = vector.load %arg2[%c0_6, %c0_7, %c32] : memref<1x16x96xf32, #tpu.memory_space<vmem>>, vector<1x16x32xf32>
    tpu.vector_store %arg2[%c0_6, %c0_7, %c32], %7 {strides = array<i32>} : memref<1x16x96xf32, #tpu.memory_space<vmem>>, vector<1x16x32xf32>,
    %c1_i32 = arith.constant 1 : i32
    %9 = tpu.dynamic_rotate %0 by %c1_i32 dim 1 : vector<1x16x32xf32>, i32 -> vector<1x16x32xf32>
    %c1_i32_8 = arith.constant 1 : i32
    %10 = vector.broadcast %c1_i32_8 : i32 to vector<1x16x32xi32>
    %11 = arith.cmpi sge, %2, %10 : vector<1x16x32xi32>
    %12 = arith.select %11, %9, %3 : vector<1x16x32xi1>, vector<1x16x32xf32>
    %c0_9 = arith.constant 0 : index
    %c0_10 = arith.constant 0 : index
    %c64 = arith.constant 64 : index
    %13 = vector.load %arg2[%c0_9, %c0_10, %c64] : memref<1x16x96xf32, #tpu.memory_space<vmem>>, vector<1x16x32xf32>
    tpu.vector_store %arg2[%c0_9, %c0_10, %c64], %12 {strides = array<i32>} : memref<1x16x96xf32, #tpu.memory_space<vmem>>, vector<1x16x32xf32>,
    return
  }
  func.func @transform_0(%arg0: i32) -> (i32, i32, i32) {
    %c0_i32 = arith.constant 0 : i32
    %c0_i32_0 = arith.constant 0 : i32
    %c0_i32_1 = arith.constant 0 : i32
    return %arg0, %c0_i32, %c0_i32_0 : i32, i32, i32
  }
  func.func @transform_1(%arg0: i32) -> (i32, i32, i32) {
    %c0_i32 = arith.constant 0 : i32
    %c0_i32_0 = arith.constant 0 : i32
    %c0_i32_1 = arith.constant 0 : i32
    return %arg0, %c0_i32, %c0_i32_0 : i32, i32, i32
  }
}

</mosaic_0001>

<llo_original>
// kernel: tpu_custom_call.1
$region0: #{tpu_custom_call.1}
  #allocation0 [shape = 'u32[]', space=smem, size = 0x4, offset = 0x4, fixed_abs, tag = 'smem constant byte address 0x4 - core index']
  #allocation1 [shape = 'u32[144,128]{1,0:T(1,128)}', space=vmem, size = 0x12000, scoped, tag = 'internal scratch']
  %s0 = inlined_call_operand.hbm [shape: f32[2,16,32], index: 0, kind: input, shape index: {}]
  %s1 = inlined_call_operand.hbm [shape: f32[2,16,96], index: 1, kind: output, shape index: {}]
  %s2 = sld [smem:[#allocation0]]
  $region41: #{tpu_custom_call.1} parent=0
    _
  %s4 = ssub.s32 1, %s2
  %s5 = scalar_select 0, %s4, %s2
  $region1: #{tpu_custom_call.1} parent=0
    #allocation2 [shape = 'u8[16384]{0}', space=vmem, size = 0x4000, scoped, tag = 'input window, operand 0']
    #allocation3 [shape = 's32[2]{0}', space=sflag, size = 0x8, scoped, tag = 'scoped memory for tpu_custom_call.1']
    #allocation4 [shape = 's32[2]{0}', space=sflag, size = 0x8, scoped, tag = 'scoped memory for tpu_custom_call.1']
    #allocation5 [shape = 'u8[16384]{0}', space=vmem, size = 0x4000, scoped, tag = 'output window, operand 0']
    %6 = vsyncpa [#allocation3], 0
    %s7 = scalar_lea.sflag [#allocation3], 1
    %8 = vsyncpa %s7, 0
    %9 = vsyncpa [#allocation4], 0
    %s10 = scalar_lea.sflag [#allocation4], 1
    %11 = vsyncpa %s10, 0
    loop: start=0, step=1, limit=4
    $region2: #{tpu_custom_call.1} parent=1 // loop_pre_header
      _
    $region3: #{tpu_custom_call.1} parent=1 // loop_header
      %s13 = sphi 0, %s17
      %p14 = scmp.ge.s32.totalorder %s13, 4
      %s23 = sphi 0, %s25
      %s26 = sphi 0, %s23
      %s27 = sphi 0, %s26
      %s43 = sphi 0, %s27
      %s49 = sphi 0, %s51
      %s52 = sphi 0, %s49
      %s53 = sphi 0, %s52
      %s69 = sphi 0, %s53
    $region4: #{tpu_custom_call.1} parent=1 // loop_header_branch
      %16 = sbr.rel (%p14) target = $region8
    $region5: #{tpu_custom_call.1} parent=1 // loop_body
      %s18 = ssub.s32 %s13, 1
      %s19 = ssub.s32 %s13, 2
      %s20 = sadd.s32 %s13, 1
      %s21 = ssub.s32 %s13, %s20
      %p22 = scmp.eq.s32.totalorder %s21, 0
      %s24 = sadd.s32 %s23, 1
      %s25 = scalar_select %p22, %s23, %s24
      %p28 = pneg %p22
      %p29 = scmp.eq.s32.totalorder %s13, 1
      %p30 = por %p28, %p29
      %p31 = scmp.ne.s32.totalorder %s23, %s26
      %p32 = scmp.eq.s32.totalorder %s13, 0
      %p33 = por %p31, %p32
      %p34 = scmp.ne.s32.totalorder %s23, %s26
      %p35 = scmp.eq.s32.totalorder %s18, 1
      %p36 = por %p34, %p35
      %p37 = scmp.ne.s32.totalorder %s26, %s27
      %p38 = scmp.eq.s32.totalorder %s18, 0
      %p39 = por %p37, %p38
      %p40 = scmp.ne.s32.totalorder %s26, %s27
      %p41 = scmp.eq.s32.totalorder %s19, 1
      %p42 = por %p40, %p41
      %p44 = scmp.ne.s32.totalorder %s27, %s43
      %p45 = scmp.eq.s32.totalorder %s19, 0
      %p46 = por %p44, %p45
      %s47 = ssub.s32 %s13, %s20
      %p48 = scmp.eq.s32.totalorder %s47, 0
      %s50 = sadd.s32 %s49, 1
      %s51 = scalar_select %p48, %s49, %s50
      %p54 = pneg %p48
      %p55 = scmp.eq.s32.totalorder %s13, 1
      %p56 = por %p54, %p55
      %p57 = scmp.ne.s32.totalorder %s49, %s52
      %p58 = scmp.eq.s32.totalorder %s13, 0
      %p59 = por %p57, %p58
      %p60 = scmp.ne.s32.totalorder %s49, %s52
      %p61 = scmp.eq.s32.totalorder %s18, 1
      %p62 = por %p60, %p61
      %p63 = scmp.ne.s32.totalorder %s52, %s53
      %p64 = scmp.eq.s32.totalorder %s18, 0
      %p65 = por %p63, %p64
      %p66 = scmp.ne.s32.totalorder %s52, %s53
      %p67 = scmp.eq.s32.totalorder %s19, 1
      %p68 = por %p66, %p67
      %p70 = scmp.ne.s32.totalorder %s53, %s69
      %p71 = scmp.eq.s32.totalorder %s19, 0
      %p72 = por %p70, %p71
      %p73 = scmp.le.s32.totalorder 1, %s13
      %p74 = scmp.lt.s32.totalorder %s13, 3
      %p75 = pnand %p73, %p74
      %p76 = pneg %p75
      // Predicated region
      $region9: #{tpu_custom_call.1} parent=5 // pred_check
        _
      $region10: #{tpu_custom_call.1} parent=5 // pred_check_branch
        %78 = sbr.rel (%p75) target = $region12
      $region11: #{tpu_custom_call.1} parent=5 // pred_region
        %s79 = ssub.s32 %s13, 1
      $region12: #{tpu_custom_call.1} parent=5 // pred_fallthru
        _
      %p80 = scmp.lt.s32.totalorder %s13, 2
      // Predicated region
      $region13: #{tpu_custom_call.1} parent=5 // pred_check
        %p81 = pneg %p80
      $region14: #{tpu_custom_call.1} parent=5 // pred_check_branch
        %83 = sbr.rel (%p81) target = $region16
      $region15: #{tpu_custom_call.1} parent=5 // pred_region
        // Predicated region
        $region17: #{tpu_custom_call.1} parent=15 // pred_check
          %p84 = pneg %p33
        $region18: #{tpu_custom_call.1} parent=15 // pred_check_branch
          %86 = sbr.rel (%p84) target = $region20
        $region19: #{tpu_custom_call.1} parent=15 // pred_region
          %s87 = sand.u32 %s23, 1
          %s88 = scalar_lea.sflag [#allocation3], %s87
          %s89 = sand.u32 %s23, 1
          %s90 = smul.addr %s89, 16
          %s91 = scalar_lea.vmem [#allocation2], %s90
          %s93 = ssub.s32 256, 256
          %94 = vsyncadd %s88, %s93
          %s95 = smul.addr %s13, 2
          %s96 = smul.addr %s95, 128
          %s97 = scalar_lea.hbm %s0, %s96
          %s98 = sshll.u32 %s91, 4
          %s99 = int_to_ptr.vmem [resolvable:$true] %s98
          %104 = dma.hbm_to_vmem [thread:$0]  %s97, 256, %s99, %s88, 128, 128, 8
        $region20: #{tpu_custom_call.1} parent=15 // pred_fallthru
          _
      $region16: #{tpu_custom_call.1} parent=5 // pred_fallthru
        _
      %p105 = scmp.le.s32.totalorder 1, %s13
      %p106 = scmp.lt.s32.totalorder %s13, 3
      %p107 = pnand %p105, %p106
      %p108 = pneg %p107
      // Predicated region
      $region21: #{tpu_custom_call.1} parent=5 // pred_check
        _
      $region22: #{tpu_custom_call.1} parent=5 // pred_check_branch
        %110 = sbr.rel (%p107) target = $region24
      $region23: #{tpu_custom_call.1} parent=5 // pred_region
        %s111 = ssub.s32 %s13, 1
        %s112 = sand.u32 %s26, 1
        %s113 = scalar_lea.sflag [#allocation3], %s112
        %s114 = sand.u32 %s26, 1
        %s115 = smul.addr %s114, 16
        %s116 = scalar_lea.vmem [#allocation2], %s115
        // Predicated region
        $region25: #{tpu_custom_call.1} parent=23 // pred_check
          %p117 = pneg %p39
        $region26: #{tpu_custom_call.1} parent=23 // pred_check_branch
          %119 = sbr.rel (%p117) target = $region28
        $region27: #{tpu_custom_call.1} parent=23 // pred_region
          %120 = dma.done %s113, 256
        $region28: #{tpu_custom_call.1} parent=23 // pred_fallthru
          _
        %s121 = sand.u32 %s26, 1
        %s122 = scalar_lea.sflag [#allocation3], %s121
        %s123 = sand.u32 %s26, 1
        %s124 = smul.addr %s123, 16
        %s125 = scalar_lea.vmem [#allocation2], %s124
        %p126 = pneg %p39
        %p127 = pneg %p36
        %p128 = pneg %p65
        %p129 = pneg %p62
        %s130 = sand.u32 %s52, 1
        %s131 = scalar_lea.sflag [#allocation4], %s130
        %s132 = sand.u32 %s52, 1
        %s133 = smul.addr %s132, 16
        %s134 = scalar_lea.vmem [#allocation5], %s133
        %v135 = vld [vmem:[%s116] sm:$0xff]
        %v136 = vld [vmem:[%s116 + $0x8] sm:$0xff]
        %vm137 = vcmask 261120
        %138 = vst.msk [vmem:[%s134] sm:$0xff] %vm137, %v135
        %139 = vst.msk [vmem:[%s134 + $0x8] sm:$0xff] %vm137, %v136
        %v140 = vlaneseq
        %v141 = vshrl.u32 %v140, 7
        %v142 = vadd.s32 %v141, 8
        %v143 = vrot.slane %v135, 1
        %v144 = vrot.slane %v136, 1
        %vm145 = vcmp.lt.s32.totalorder %v141, 7
        %v146 = vsel %vm145, %v143, %v144
        %v147 = vsel %vm145, %v144, %v143
        %vm148 = vcmp.lt.s32.totalorder %v141, 15
        %vm149 = vcmp.lt.s32.totalorder %v142, 15
        %v150 = vsel %vm148, %v146, 0.0
        %v151 = vsel %vm149, %v147, 0.0
        %154 = vrot.lane.b32.xlu0 %v150, 32
        %v155 = vpop.permute.xlu0 %154
        %156 = vrot.lane.b32.xlu0 %v151, 32
        %v157 = vpop.permute.xlu0 %156
        %vm160 = vcmask 523520
        %161 = vst.msk [vmem:[%s134] sm:$0xff] %vm160, %v155
        %162 = vst.msk [vmem:[%s134 + $0x8] sm:$0xff] %vm160, %v157
        %v163 = vrot.slane %v135, 7
        %v164 = vrot.slane %v136, 7
        %vm165 = vcmp.lt.s32.totalorder %v141, 1
        %v166 = vsel %vm165, %v163, %v164
        %v167 = vsel %vm165, %v164, %v163
        %vm168 = vcmp.ge.s32.totalorder %v141, 1
        %vm169 = vcmp.ge.s32.totalorder %v142, 1
        %v170 = vsel %vm168, %v167, 0.0
        %v171 = vsel %vm169, %v166, 0.0
        %174 = vrot.lane.b32.xlu0 %v170, 64
        %v175 = vpop.permute.xlu0 %174
        %176 = vrot.lane.b32.xlu0 %v171, 64
        %v177 = vpop.permute.xlu0 %176
        %vm180 = vcmask 785920
        %181 = vst.msk [vmem:[%s134] sm:$0xff] %vm180, %v175
        %182 = vst.msk [vmem:[%s134 + $0x8] sm:$0xff] %vm180, %v177
        %s183 = sand.u32 %s52, 1
        %s184 = scalar_lea.sflag [#allocation4], %s183
        %s185 = sand.u32 %s52, 1
        %s186 = smul.addr %s185, 16
        %s187 = scalar_lea.vmem [#allocation5], %s186
        // Predicated region
        $region29: #{tpu_custom_call.1} parent=23 // pred_check
          %p188 = pneg %p62
        $region30: #{tpu_custom_call.1} parent=23 // pred_check_branch
          %190 = sbr.rel (%p188) target = $region32
        $region31: #{tpu_custom_call.1} parent=23 // pred_region
          %s192 = ssub.s32 256, 256
          %193 = vsyncadd %s184, %s192
          %s194 = smul.addr %s18, 2
          %s195 = smul.addr %s194, 128
          %s196 = scalar_lea.hbm %s1, %s195
          %s197 = sshll.u32 %s187, 4
          %s198 = int_to_ptr.vmem [resolvable:$true] %s197
          %203 = dma.vmem_to_hbm [thread:$0]  %s198, 256, %s196, %s184, 128, 128, 8
        $region32: #{tpu_custom_call.1} parent=23 // pred_fallthru
          _
      $region24: #{tpu_custom_call.1} parent=5 // pred_fallthru
        _
      %p204 = scmp.le.s32.totalorder 2, %s13
      // Predicated region
      $region33: #{tpu_custom_call.1} parent=5 // pred_check
        %p205 = pneg %p204
      $region34: #{tpu_custom_call.1} parent=5 // pred_check_branch
        %207 = sbr.rel (%p205) target = $region36
      $region35: #{tpu_custom_call.1} parent=5 // pred_region
        %s208 = ssub.s32 %s13, 2
        // Predicated region
        $region37: #{tpu_custom_call.1} parent=35 // pred_check
          %p209 = pneg %p68
        $region38: #{tpu_custom_call.1} parent=35 // pred_check_branch
          %211 = sbr.rel (%p209) target = $region40
        $region39: #{tpu_custom_call.1} parent=35 // pred_region
          %s212 = sand.u32 %s53, 1
          %s213 = scalar_lea.sflag [#allocation4], %s212
          %s214 = sand.u32 %s53, 1
          %s215 = smul.addr %s214, 16
          %s216 = scalar_lea.vmem [#allocation5], %s215
          %217 = dma.done %s213, 256
        $region40: #{tpu_custom_call.1} parent=35 // pred_fallthru
          _
      $region36: #{tpu_custom_call.1} parent=5 // pred_fallthru
        _
    $region6: #{tpu_custom_call.1} parent=1 // loop_footer
      %s17 = sadd.s32 1, %s13
    $region7: #{tpu_custom_call.1} parent=1 // loop_footer_branch
      %12 = sbr.rel target = $region3
    $region8: #{tpu_custom_call.1} parent=1 // loop_exit
      _
    %218 = vsyncpa [#allocation3], 1
    %s219 = scalar_lea.sflag [#allocation3], 1
    %220 = vsyncpa %s219, 1
    %221 = vsyncpa [#allocation4], 1
    %s222 = scalar_lea.sflag [#allocation4], 1
    %223 = vsyncpa %s222, 1

</llo_original>
